<compile_context>
chip_gen: v7x
topology: tpu7x:2x2x1
jax: 0.10.0
libtpu: 0.0.40
codegen_flags: <defaults>
</compile_context>

<pallas_src>
import math

import jax
import jax.numpy as jnp
from jax.experimental import pallas as pl
from jax.experimental.pallas import tpu as pltpu

LANE = 128
_VMEM_PIPELINE_BUDGET = 8 * 1024 * 1024   # bytes of double-buffered blocks to aim for
_TARGET_GRID_STEPS = 4                    # keep both v7x TensorCores busy


def _round_up(x, m):
    return ((x + m - 1) // m) * m


def _min_sublanes(dtype):
    """Minimum second-to-last tile dim for a dtype (8 f32 / 16 bf16 / 32 int8)."""
    itemsize = jnp.dtype(dtype).itemsize
    if itemsize >= 4:
        return 8
    return 8 * (4 // itemsize)


def _make_kernel(L):
    def kernel(*refs):
        w_ref = refs[0]            # SMEM (L,) raw weights, relu applied here
        x_refs = refs[1:1 + L]     # L VMEM tiles (tr, width)
        o_ref = refs[1 + L]        # VMEM output tile (tr, width)
        acc = jnp.zeros(o_ref.shape, jnp.float32)
        for i in range(L):         # L is small & static -> unrolled
            wi = jnp.maximum(w_ref[i], 0.0).astype(jnp.float32)
            acc = acc + x_refs[i][...].astype(jnp.float32) * wi
        o_ref[...] = acc.astype(o_ref.dtype)
    return kernel


def _weight_sum_flat(flat_xs, w, total, out_dtype):
    """Weighted sum of L flat arrays of `total` elements (total % 128 == 0)."""
    L = len(flat_xs)
    itemsize = jnp.dtype(out_dtype).itemsize
    min_sub = _min_sublanes(out_dtype)

    # Pick the widest lane-dense row (multiple of 128) that divides `total`
    # while leaving enough rows for >= 2*min_sub sublanes of tiling.
    width = LANE
    for cand in (512, 256):
        if total % cand == 0 and (total // cand) >= 2 * min_sub:
            width = cand
            break
    n_rows = total // width

    # dtype-aware row tile: ~8 MiB of pipelined VMEM across 2x(L inputs + 1 out).
    max_rows = _VMEM_PIPELINE_BUDGET // (2 * (L + 1) * width * itemsize)
    max_rows = max(min_sub, (max_rows // min_sub) * min_sub)
    # Shrink tile (if room) so the parallel grid has several steps.
    tr = min(max_rows, _round_up(pl.cdiv(n_rows, _TARGET_GRID_STEPS), min_sub))
    tr = max(min_sub, min(tr, _round_up(n_rows, min_sub)))
    grid = (pl.cdiv(n_rows, tr),)

    footprint = 2 * (L + 1) * tr * width * itemsize
    vmem_limit = int(min(48 * 1024 * 1024, max(16 * 1024 * 1024, 2 * footprint)))

    x2ds = [f.reshape(n_rows, width) for f in flat_xs]   # free reshapes

    out = pl.pallas_call(
        _make_kernel(L),
        out_shape=jax.ShapeDtypeStruct((n_rows, width), out_dtype),
        grid=grid,
        in_specs=[pl.BlockSpec(memory_space=pltpu.MemorySpace.SMEM)]
        + [pl.BlockSpec((tr, width), lambda i: (i, 0)) for _ in range(L)],
        out_specs=pl.BlockSpec((tr, width), lambda i: (i, 0)),
        compiler_params=pltpu.CompilerParams(
            dimension_semantics=("parallel",),
            vmem_limit_bytes=vmem_limit,
        ),
    )(w, *x2ds)
    return out.reshape(-1)


def weight_sum(xs, w):
    """xs: list of same-shape arrays (e.g. NCHW). w: (len(xs),) parameter."""
    L = len(xs)
    assert w.shape == (L,)
    orig_shape = xs[0].shape
    out_dtype = xs[0].dtype
    total = math.prod(orig_shape)

    w32 = w.astype(jnp.float32)
    flats = [x.reshape(-1) for x in xs]                 # free reshapes
    aligned = (total // LANE) * LANE

    if aligned == 0:
        # Tiny input: pure JAX (no kernel worth launching).
        w_relu = jnp.maximum(w32, 0.0)
        out = sum(f.astype(jnp.float32) * w_relu[i] for i, f in enumerate(flats))
        return out.astype(out_dtype).reshape(orig_shape)

    if aligned == total:
        head = _weight_sum_flat(flats, w32, total, out_dtype)
        return head.reshape(orig_shape)

    # Rare unaligned case: kernel on the 128-aligned prefix, <128-element tail
    # in plain JAX (avoids padding every input in HBM).
    head = _weight_sum_flat([f[:aligned] for f in flats], w32, aligned, out_dtype)
    w_relu = jnp.maximum(w32, 0.0)
    tail = sum(f[aligned:].astype(jnp.float32) * w_relu[i]
               for i, f in enumerate(flats)).astype(out_dtype)
    return jnp.concatenate([head, tail]).reshape(orig_shape)


if __name__ == "__main__":
    key = jax.random.PRNGKey(0)
    length = 3
    B, C, H, Wd = 2, 4, 16, 16

    keys = jax.random.split(key, length)
    xs = [jax.random.normal(k, (B, C, H, Wd), dtype=jnp.float32) for k in keys]

    # Parameter init exactly as the module: torch.Tensor(length).fill_(1)
    w = jnp.ones((length,), dtype=jnp.float32)

    out = jax.block_until_ready(weight_sum(xs, w))

    # Reference check (pure JAX)
    w_relu = jnp.maximum(w, 0.0)
    ref = sum(x * w_relu[i] for i, x in enumerate(xs))
    assert out.shape == (B, C, H, Wd)
    assert jnp.allclose(out, ref, atol=1e-5, rtol=1e-5)

    print("KERNEL_OK")
</pallas_src>

<mosaic_0001>
module attributes {stable_mosaic.version = 11 : i64} {
  func.func @kernel(%arg0: i32, %arg1: memref<3xf32, #tpu.memory_space<smem>>, %arg2: memref<8x128xf32, #tpu.memory_space<vmem>>, %arg3: memref<8x128xf32, #tpu.memory_space<vmem>>, %arg4: memref<8x128xf32, #tpu.memory_space<vmem>>, %arg5: memref<8x128xf32, #tpu.memory_space<vmem>>) attributes {dimension_semantics = [#tpu.dimension_semantics<parallel>], iteration_bounds = array<i64: 2>, scalar_prefetch = 0 : i64, scratch_operands = 0 : i64, tpu.core_type = #tpu.core_type<tc>, window_params = [{transform_indices = @transform_0, window_bounds = array<i64: 3>}, {transform_indices = @transform_1, window_bounds = array<i64: 8, 128>}, {transform_indices = @transform_2, window_bounds = array<i64: 8, 128>}, {transform_indices = @transform_3, window_bounds = array<i64: 8, 128>}, {transform_indices = @transform_4, window_bounds = array<i64: 8, 128>}]} {
    %cst = arith.constant 0.000000e+00 : f32
    %0 = vector.broadcast %cst : f32 to vector<8x128xf32>
    %c0 = arith.constant 0 : index
    %1 = memref.load %arg1[%c0] : memref<3xf32, #tpu.memory_space<smem>>
    %cst_0 = arith.constant 0.000000e+00 : f32
    %2 = arith.maximumf %1, %cst_0 : f32
    %c0_1 = arith.constant 0 : index
    %c0_2 = arith.constant 0 : index
    %3 = vector.load %arg2[%c0_1, %c0_2] : memref<8x128xf32, #tpu.memory_space<vmem>>, vector<8x128xf32>
    %4 = vector.broadcast %2 : f32 to vector<8x128xf32>
    %5 = arith.mulf %3, %4 : vector<8x128xf32>
    %6 = arith.addf %0, %5 : vector<8x128xf32>
    %c1 = arith.constant 1 : index
    %7 = memref.load %arg1[%c1] : memref<3xf32, #tpu.memory_space<smem>>
    %cst_3 = arith.constant 0.000000e+00 : f32
    %8 = arith.maximumf %7, %cst_3 : f32
    %c0_4 = arith.constant 0 : index
    %c0_5 = arith.constant 0 : index
    %9 = vector.load %arg3[%c0_4, %c0_5] : memref<8x128xf32, #tpu.memory_space<vmem>>, vector<8x128xf32>
    %10 = vector.broadcast %8 : f32 to vector<8x128xf32>
    %11 = arith.mulf %9, %10 : vector<8x128xf32>
    %12 = arith.addf %6, %11 : vector<8x128xf32>
    %c2 = arith.constant 2 : index
    %13 = memref.load %arg1[%c2] : memref<3xf32, #tpu.memory_space<smem>>
    %cst_6 = arith.constant 0.000000e+00 : f32
    %14 = arith.maximumf %13, %cst_6 : f32
    %c0_7 = arith.constant 0 : index
    %c0_8 = arith.constant 0 : index
    %15 = vector.load %arg4[%c0_7, %c0_8] : memref<8x128xf32, #tpu.memory_space<vmem>>, vector<8x128xf32>
    %16 = vector.broadcast %14 : f32 to vector<8x128xf32>
    %17 = arith.mulf %15, %16 : vector<8x128xf32>
    %18 = arith.addf %12, %17 : vector<8x128xf32>
    %c0_9 = arith.constant 0 : index
    %c0_10 = arith.constant 0 : index
    %19 = vector.load %arg5[%c0_9, %c0_10] : memref<8x128xf32, #tpu.memory_space<vmem>>, vector<8x128xf32>
    tpu.vector_store %arg5[%c0_9, %c0_10], %18 {strides = array<i32>} : memref<8x128xf32, #tpu.memory_space<vmem>>, vector<8x128xf32>,
    return
  }
  func.func @transform_0(%arg0: i32) -> i32 {
    %c0_i32 = arith.constant 0 : i32
    %c0_i32_0 = arith.constant 0 : i32
    return %c0_i32 : i32
  }
  func.func @transform_1(%arg0: i32) -> (i32, i32) {
    %c0_i32 = arith.constant 0 : i32
    %c0_i32_0 = arith.constant 0 : i32
    return %arg0, %c0_i32 : i32, i32
  }
  func.func @transform_2(%arg0: i32) -> (i32, i32) {
    %c0_i32 = arith.constant 0 : i32
    %c0_i32_0 = arith.constant 0 : i32
    return %arg0, %c0_i32 : i32, i32
  }
  func.func @transform_3(%arg0: i32) -> (i32, i32) {
    %c0_i32 = arith.constant 0 : i32
    %c0_i32_0 = arith.constant 0 : i32
    return %arg0, %c0_i32 : i32, i32
  }
  func.func @transform_4(%arg0: i32) -> (i32, i32) {
    %c0_i32 = arith.constant 0 : i32
    %c0_i32_0 = arith.constant 0 : i32
    return %arg0, %c0_i32 : i32, i32
  }
}

</mosaic_0001>

<llo_original>
// kernel: tpu_custom_call.1
$region0: #{tpu_custom_call.1}
  #allocation0 [shape = 'u32[]', space=smem, size = 0x4, offset = 0x4, fixed_abs, tag = 'smem constant byte address 0x4 - core index']
  #allocation1 [shape = 'u32[144,128]{1,0:T(1,128)}', space=vmem, size = 0x12000, scoped, tag = 'internal scratch']
  %s0 = inlined_call_operand.hbm [shape: f32[3], index: 0, kind: input, shape index: {}]
  %s1 = inlined_call_operand.hbm [shape: f32[16,128], index: 1, kind: input, shape index: {}]
  %s2 = inlined_call_operand.hbm [shape: f32[16,128], index: 2, kind: input, shape index: {}]
  %s3 = inlined_call_operand.hbm [shape: f32[16,128], index: 3, kind: input, shape index: {}]
  %s4 = inlined_call_operand.hbm [shape: f32[16,128], index: 4, kind: output, shape index: {}]
  %s5 = sld [smem:[#allocation0]]
  $region65: #{tpu_custom_call.1} parent=0
    _
  %s7 = ssub.s32 1, %s5
  %s8 = scalar_select 0, %s7, %s5
  $region1: #{tpu_custom_call.1} parent=0
    #allocation2 [shape = 'u8[512]{0}', space=smem, size = 0x200, scoped, tag = 'input window, operand 0, single buffered']
    #allocation3 [shape = 's32[2]{0}', space=sflag, size = 0x8, scoped, tag = 'scoped memory for tpu_custom_call.1']
    #allocation4 [shape = 's32[2]{0}', space=sflag, size = 0x8, scoped, tag = 'scoped memory for tpu_custom_call.1']
    #allocation5 [shape = 's32[2]{0}', space=sflag, size = 0x8, scoped, tag = 'scoped memory for tpu_custom_call.1']
    #allocation6 [shape = 'u8[8192]{0}', space=vmem, size = 0x2000, scoped, tag = 'input window, operand 1']
    #allocation7 [shape = 'u8[8192]{0}', space=vmem, size = 0x2000, scoped, tag = 'input window, operand 2']
    #allocation8 [shape = 's32[2]{0}', space=sflag, size = 0x8, scoped, tag = 'scoped memory for tpu_custom_call.1']
    #allocation9 [shape = 'u8[8192]{0}', space=vmem, size = 0x2000, scoped, tag = 'input window, operand 3']
    #allocation10 [shape = 'u8[8192]{0}', space=vmem, size = 0x2000, scoped, tag = 'output window, operand 0']
    %9 = vsyncpa [#allocation5], 0
    %10 = vsyncpa [#allocation3], 0
    %s11 = scalar_lea.sflag [#allocation3], 1
    %12 = vsyncpa %s11, 0
    %13 = vsyncpa [#allocation8], 0
    %s14 = scalar_lea.sflag [#allocation8], 1
    %15 = vsyncpa %s14, 0
    %16 = vsyncpa [#allocation4], 0
    %s17 = scalar_lea.sflag [#allocation4], 1
    %18 = vsyncpa %s17, 0
    loop: start=0, step=1, limit=4
    $region2: #{tpu_custom_call.1} parent=1 // loop_pre_header
      _
    $region3: #{tpu_custom_call.1} parent=1 // loop_header
      %s20 = sphi 0, %s24
      %p21 = scmp.ge.s32.totalorder %s20, 4
      %s28 = sphi 0, %s28
      %s30 = sphi 0, %s28
      %s31 = sphi 0, %s30
      %s45 = sphi 0, %s31
      %s51 = sphi 0, %s53
      %s54 = sphi 0, %s51
      %s55 = sphi 0, %s54
      %s71 = sphi 0, %s55
      %s77 = sphi 0, %s79
      %s80 = sphi 0, %s77
      %s81 = sphi 0, %s80
      %s97 = sphi 0, %s81
      %s103 = sphi 0, %s105
      %s106 = sphi 0, %s103
      %s107 = sphi 0, %s106
      %s123 = sphi 0, %s107
      %s129 = sphi 0, %s131
      %s132 = sphi 0, %s129
      %s133 = sphi 0, %s132
      %s149 = sphi 0, %s133
    $region4: #{tpu_custom_call.1} parent=1 // loop_header_branch
      %23 = sbr.rel (%p21) target = $region8
    $region5: #{tpu_custom_call.1} parent=1 // loop_body
      %s25 = ssub.s32 %s20, 1
      %s26 = ssub.s32 %s20, 2
      %s27 = sadd.s32 %s20, 1
      %s29 = sadd.s32 %s28, 1
      %p32 = scmp.eq.s32.totalorder %s20, 1
      %p33 = scmp.ne.s32.totalorder %s28, %s30
      %p34 = scmp.eq.s32.totalorder %s20, 0
      %p35 = por %p33, %p34
      %p36 = scmp.ne.s32.totalorder %s28, %s30
      %p37 = scmp.eq.s32.totalorder %s25, 1
      %p38 = por %p36, %p37
      %p39 = scmp.ne.s32.totalorder %s30, %s31
      %p40 = scmp.eq.s32.totalorder %s25, 0
      %p41 = por %p39, %p40
      %p42 = scmp.ne.s32.totalorder %s30, %s31
      %p43 = scmp.eq.s32.totalorder %s26, 1
      %p44 = por %p42, %p43
      %p46 = scmp.ne.s32.totalorder %s31, %s45
      %p47 = scmp.eq.s32.totalorder %s26, 0
      %p48 = por %p46, %p47
      %s49 = ssub.s32 %s20, %s27
      %p50 = scmp.eq.s32.totalorder %s49, 0
      %s52 = sadd.s32 %s51, 1
      %s53 = scalar_select %p50, %s51, %s52
      %p56 = pneg %p50
      %p57 = scmp.eq.s32.totalorder %s20, 1
      %p58 = por %p56, %p57
      %p59 = scmp.ne.s32.totalorder %s51, %s54
      %p60 = scmp.eq.s32.totalorder %s20, 0
      %p61 = por %p59, %p60
      %p62 = scmp.ne.s32.totalorder %s51, %s54
      %p63 = scmp.eq.s32.totalorder %s25, 1
      %p64 = por %p62, %p63
      %p65 = scmp.ne.s32.totalorder %s54, %s55
      %p66 = scmp.eq.s32.totalorder %s25, 0
      %p67 = por %p65, %p66
      %p68 = scmp.ne.s32.totalorder %s54, %s55
      %p69 = scmp.eq.s32.totalorder %s26, 1
      %p70 = por %p68, %p69
      %p72 = scmp.ne.s32.totalorder %s55, %s71
      %p73 = scmp.eq.s32.totalorder %s26, 0
      %p74 = por %p72, %p73
      %s75 = ssub.s32 %s20, %s27
      %p76 = scmp.eq.s32.totalorder %s75, 0
      %s78 = sadd.s32 %s77, 1
      %s79 = scalar_select %p76, %s77, %s78
      %p82 = pneg %p76
      %p83 = scmp.eq.s32.totalorder %s20, 1
      %p84 = por %p82, %p83
      %p85 = scmp.ne.s32.totalorder %s77, %s80
      %p86 = scmp.eq.s32.totalorder %s20, 0
      %p87 = por %p85, %p86
      %p88 = scmp.ne.s32.totalorder %s77, %s80
      %p89 = scmp.eq.s32.totalorder %s25, 1
      %p90 = por %p88, %p89
      %p91 = scmp.ne.s32.totalorder %s80, %s81
      %p92 = scmp.eq.s32.totalorder %s25, 0
      %p93 = por %p91, %p92
      %p94 = scmp.ne.s32.totalorder %s80, %s81
      %p95 = scmp.eq.s32.totalorder %s26, 1
      %p96 = por %p94, %p95
      %p98 = scmp.ne.s32.totalorder %s81, %s97
      %p99 = scmp.eq.s32.totalorder %s26, 0
      %p100 = por %p98, %p99
      %s101 = ssub.s32 %s20, %s27
      %p102 = scmp.eq.s32.totalorder %s101, 0
      %s104 = sadd.s32 %s103, 1
      %s105 = scalar_select %p102, %s103, %s104
      %p108 = pneg %p102
      %p109 = scmp.eq.s32.totalorder %s20, 1
      %p110 = por %p108, %p109
      %p111 = scmp.ne.s32.totalorder %s103, %s106
      %p112 = scmp.eq.s32.totalorder %s20, 0
      %p113 = por %p111, %p112
      %p114 = scmp.ne.s32.totalorder %s103, %s106
      %p115 = scmp.eq.s32.totalorder %s25, 1
      %p116 = por %p114, %p115
      %p117 = scmp.ne.s32.totalorder %s106, %s107
      %p118 = scmp.eq.s32.totalorder %s25, 0
      %p119 = por %p117, %p118
      %p120 = scmp.ne.s32.totalorder %s106, %s107
      %p121 = scmp.eq.s32.totalorder %s26, 1
      %p122 = por %p120, %p121
      %p124 = scmp.ne.s32.totalorder %s107, %s123
      %p125 = scmp.eq.s32.totalorder %s26, 0
      %p126 = por %p124, %p125
      %s127 = ssub.s32 %s20, %s27
      %p128 = scmp.eq.s32.totalorder %s127, 0
      %s130 = sadd.s32 %s129, 1
      %s131 = scalar_select %p128, %s129, %s130
      %p134 = pneg %p128
      %p135 = scmp.eq.s32.totalorder %s20, 1
      %p136 = por %p134, %p135
      %p137 = scmp.ne.s32.totalorder %s129, %s132
      %p138 = scmp.eq.s32.totalorder %s20, 0
      %p139 = por %p137, %p138
      %p140 = scmp.ne.s32.totalorder %s129, %s132
      %p141 = scmp.eq.s32.totalorder %s25, 1
      %p142 = por %p140, %p141
      %p143 = scmp.ne.s32.totalorder %s132, %s133
      %p144 = scmp.eq.s32.totalorder %s25, 0
      %p145 = por %p143, %p144
      %p146 = scmp.ne.s32.totalorder %s132, %s133
      %p147 = scmp.eq.s32.totalorder %s26, 1
      %p148 = por %p146, %p147
      %p150 = scmp.ne.s32.totalorder %s133, %s149
      %p151 = scmp.eq.s32.totalorder %s26, 0
      %p152 = por %p150, %p151
      %p153 = scmp.le.s32.totalorder 1, %s20
      %p154 = scmp.lt.s32.totalorder %s20, 3
      %p155 = pnand %p153, %p154
      %p156 = pneg %p155
      // Predicated region
      $region9: #{tpu_custom_call.1} parent=5 // pred_check
        _
      $region10: #{tpu_custom_call.1} parent=5 // pred_check_branch
        %158 = sbr.rel (%p155) target = $region12
      $region11: #{tpu_custom_call.1} parent=5 // pred_region
        %s159 = ssub.s32 %s20, 1
        // Predicated region
        $region13: #{tpu_custom_call.1} parent=11 // pred_check
          %p160 = pneg %p41
        $region14: #{tpu_custom_call.1} parent=11 // pred_check_branch
          %162 = sbr.rel (%p160) target = $region16
        $region15: #{tpu_custom_call.1} parent=11 // pred_region
          %s164 = ssub.s32 16, 16
          %165 = vsyncadd [#allocation5], %s164
          %168 = dma.hbm_to_smem %s0, 16, [#allocation2], [#allocation5]
        $region16: #{tpu_custom_call.1} parent=11 // pred_fallthru
          _
      $region12: #{tpu_custom_call.1} parent=5 // pred_fallthru
        _
      %p169 = scmp.lt.s32.totalorder %s20, 2
      // Predicated region
      $region17: #{tpu_custom_call.1} parent=5 // pred_check
        %p170 = pneg %p169
      $region18: #{tpu_custom_call.1} parent=5 // pred_check_branch
        %172 = sbr.rel (%p170) target = $region20
      $region19: #{tpu_custom_call.1} parent=5 // pred_region
        // Predicated region
        $region21: #{tpu_custom_call.1} parent=19 // pred_check
          %p173 = pneg %p61
        $region22: #{tpu_custom_call.1} parent=19 // pred_check_branch
          %175 = sbr.rel (%p173) target = $region24
        $region23: #{tpu_custom_call.1} parent=19 // pred_region
          %s176 = sand.u32 %s51, 1
          %s177 = scalar_lea.sflag [#allocation3], %s176
          %s178 = sand.u32 %s51, 1
          %s179 = smul.addr %s178, 8
          %s180 = scalar_lea.vmem [#allocation6], %s179
          %s182 = ssub.s32 128, 128
          %183 = vsyncadd %s177, %s182
          %s184 = smul.addr %s20, 128
          %s185 = scalar_lea.hbm %s1, %s184
          %s187 = sshll.u32 %s180, 4
          %s188 = int_to_ptr.vmem [resolvable:$true] %s187
          %190 = dma.hbm_to_vmem [thread:$0]  %s185, 128, %s188, %s177
        $region24: #{tpu_custom_call.1} parent=19 // pred_fallthru
          _
        // Predicated region
        $region25: #{tpu_custom_call.1} parent=19 // pred_check
          %p191 = pneg %p87
        $region26: #{tpu_custom_call.1} parent=19 // pred_check_branch
          %193 = sbr.rel (%p191) target = $region28
        $region27: #{tpu_custom_call.1} parent=19 // pred_region
          %s194 = sand.u32 %s20, 1
          %s195 = scalar_lea.sflag [#allocation8], %s194
          %s196 = sand.u32 %s77, 1
          %s197 = smul.addr %s196, 8
          %s198 = scalar_lea.vmem [#allocation7], %s197
          %s200 = ssub.s32 128, 128
          %201 = vsyncadd %s195, %s200
          %s202 = smul.addr %s20, 128
          %s203 = scalar_lea.hbm %s2, %s202
          %s205 = sshll.u32 %s198, 4
          %s206 = int_to_ptr.vmem [resolvable:$true] %s205
          %208 = dma.hbm_to_vmem [thread:$0]  %s203, 128, %s206, %s195
        $region28: #{tpu_custom_call.1} parent=19 // pred_fallthru
          _
        // Predicated region
        $region29: #{tpu_custom_call.1} parent=19 // pred_check
          %p209 = pneg %p113
        $region30: #{tpu_custom_call.1} parent=19 // pred_check_branch
          %211 = sbr.rel (%p209) target = $region32
        $region31: #{tpu_custom_call.1} parent=19 // pred_region
          %s212 = sand.u32 %s20, 1
          %s213 = scalar_lea.sflag [#allocation8], %s212
          %s214 = sand.u32 %s103, 1
          %s215 = smul.addr %s214, 8
          %s216 = scalar_lea.vmem [#allocation9], %s215
          %s218 = ssub.s32 128, 128
          %219 = vsyncadd %s213, %s218
          %s220 = smul.addr %s20, 128
          %s221 = scalar_lea.hbm %s3, %s220
          %s223 = sshll.u32 %s216, 4
          %s224 = int_to_ptr.vmem [resolvable:$true] %s223
          %226 = dma.hbm_to_vmem [thread:$0]  %s221, 128, %s224, %s213
        $region32: #{tpu_custom_call.1} parent=19 // pred_fallthru
          _
      $region20: #{tpu_custom_call.1} parent=5 // pred_fallthru
        _
      %p227 = scmp.le.s32.totalorder 1, %s20
      %p228 = scmp.lt.s32.totalorder %s20, 3
      %p229 = pnand %p227, %p228
      %p230 = pneg %p229
      // Predicated region
      $region33: #{tpu_custom_call.1} parent=5 // pred_check
        _
      $region34: #{tpu_custom_call.1} parent=5 // pred_check_branch
        %232 = sbr.rel (%p229) target = $region36
      $region35: #{tpu_custom_call.1} parent=5 // pred_region
        %s233 = ssub.s32 %s20, 1
        // Predicated region
        $region37: #{tpu_custom_call.1} parent=35 // pred_check
          %p234 = pneg %p41
        $region38: #{tpu_custom_call.1} parent=35 // pred_check_branch
          %236 = sbr.rel (%p234) target = $region40
        $region39: #{tpu_custom_call.1} parent=35 // pred_region
          %237 = dma.done [#allocation5], 16
        $region40: #{tpu_custom_call.1} parent=35 // pred_fallthru
          _
        %s238 = sand.u32 %s54, 1
        %s239 = scalar_lea.sflag [#allocation3], %s238
        %s240 = sand.u32 %s54, 1
        %s241 = smul.addr %s240, 8
        %s242 = scalar_lea.vmem [#allocation6], %s241
        // Predicated region
        $region41: #{tpu_custom_call.1} parent=35 // pred_check
          %p243 = pneg %p67
        $region42: #{tpu_custom_call.1} parent=35 // pred_check_branch
          %245 = sbr.rel (%p243) target = $region44
        $region43: #{tpu_custom_call.1} parent=35 // pred_region
          %246 = dma.done %s239, 128
        $region44: #{tpu_custom_call.1} parent=35 // pred_fallthru
          _
        %s247 = sand.u32 %s25, 1
        %s248 = scalar_lea.sflag [#allocation8], %s247
        %s249 = sand.u32 %s80, 1
        %s250 = smul.addr %s249, 8
        %s251 = scalar_lea.vmem [#allocation7], %s250
        // Predicated region
        $region45: #{tpu_custom_call.1} parent=35 // pred_check
          %p252 = pneg %p93
        $region46: #{tpu_custom_call.1} parent=35 // pred_check_branch
          %254 = sbr.rel (%p252) target = $region48
        $region47: #{tpu_custom_call.1} parent=35 // pred_region
          %255 = dma.done %s248, 128
        $region48: #{tpu_custom_call.1} parent=35 // pred_fallthru
          _
        %s256 = sand.u32 %s25, 1
        %s257 = scalar_lea.sflag [#allocation8], %s256
        %s258 = sand.u32 %s106, 1
        %s259 = smul.addr %s258, 8
        %s260 = scalar_lea.vmem [#allocation9], %s259
        // Predicated region
        $region49: #{tpu_custom_call.1} parent=35 // pred_check
          %p261 = pneg %p119
        $region50: #{tpu_custom_call.1} parent=35 // pred_check_branch
          %263 = sbr.rel (%p261) target = $region52
        $region51: #{tpu_custom_call.1} parent=35 // pred_region
          %264 = dma.done %s257, 128
        $region52: #{tpu_custom_call.1} parent=35 // pred_fallthru
          _
        %265 = sfence
        %p266 = pneg %p41
        %p267 = pneg %p38
        %s268 = sand.u32 %s54, 1
        %s269 = scalar_lea.sflag [#allocation3], %s268
        %s270 = sand.u32 %s54, 1
        %s271 = smul.addr %s270, 8
        %s272 = scalar_lea.vmem [#allocation6], %s271
        %p273 = pneg %p67
        %p274 = pneg %p64
        %s275 = sand.u32 %s25, 1
        %s276 = scalar_lea.sflag [#allocation8], %s275
        %s277 = sand.u32 %s80, 1
        %s278 = smul.addr %s277, 8
        %s279 = scalar_lea.vmem [#allocation7], %s278
        %p280 = pneg %p93
        %p281 = pneg %p90
        %s282 = sand.u32 %s25, 1
        %s283 = scalar_lea.sflag [#allocation8], %s282
        %s284 = sand.u32 %s106, 1
        %s285 = smul.addr %s284, 8
        %s286 = scalar_lea.vmem [#allocation9], %s285
        %p287 = pneg %p119
        %p288 = pneg %p116
        %p289 = pneg %p145
        %p290 = pneg %p142
        %s291 = sand.u32 %s132, 1
        %s292 = scalar_lea.sflag [#allocation4], %s291
        %s293 = sand.u32 %s132, 1
        %s294 = smul.addr %s293, 8
        %s295 = scalar_lea.vmem [#allocation10], %s294
        %s296 = sld [smem:[#allocation2]]
        %s297 = smax.f32 %s296, 0.0
        %v298 = vld [vmem:[%s242] sm:$0xff]
        %v299 = vstv %s297
        %v300 = vmul.f32 %v298, %v299
        %v301 = vadd.f32 %v300, 0.0
        %s302 = sld [smem:[#allocation2 + $0x1]]
        %s303 = smax.f32 %s302, 0.0
        %v304 = vld [vmem:[%s251] sm:$0xff]
        %v305 = vstv %s303
        %v306 = vmul.f32 %v304, %v305
        %v307 = vadd.f32 %v301, %v306
        %s308 = sld [smem:[#allocation2 + $0x2]]
        %s309 = smax.f32 %s308, 0.0
        %v310 = vld [vmem:[%s260] sm:$0xff]
        %v311 = vstv %s309
        %v312 = vmul.f32 %v310, %v311
        %v313 = vadd.f32 %v307, %v312
        %314 = vst [vmem:[%s295] sm:$0xff] %v313
        %s315 = sand.u32 %s132, 1
        %s316 = scalar_lea.sflag [#allocation4], %s315
        %s317 = sand.u32 %s132, 1
        %s318 = smul.addr %s317, 8
        %s319 = scalar_lea.vmem [#allocation10], %s318
        // Predicated region
        $region53: #{tpu_custom_call.1} parent=35 // pred_check
          %p320 = pneg %p142
        $region54: #{tpu_custom_call.1} parent=35 // pred_check_branch
          %322 = sbr.rel (%p320) target = $region56
        $region55: #{tpu_custom_call.1} parent=35 // pred_region
          %s324 = ssub.s32 128, 128
          %325 = vsyncadd %s316, %s324
          %s326 = smul.addr %s25, 128
          %s327 = scalar_lea.hbm %s4, %s326
          %s329 = sshll.u32 %s319, 4
          %s330 = int_to_ptr.vmem [resolvable:$true] %s329
          %332 = dma.vmem_to_hbm [thread:$0]  %s330, 128, %s327, %s316
        $region56: #{tpu_custom_call.1} parent=35 // pred_fallthru
          _
      $region36: #{tpu_custom_call.1} parent=5 // pred_fallthru
        _
      %p333 = scmp.le.s32.totalorder 2, %s20
      // Predicated region
      $region57: #{tpu_custom_call.1} parent=5 // pred_check
        %p334 = pneg %p333
      $region58: #{tpu_custom_call.1} parent=5 // pred_check_branch
        %336 = sbr.rel (%p334) target = $region60
      $region59: #{tpu_custom_call.1} parent=5 // pred_region
        %s337 = ssub.s32 %s20, 2
        // Predicated region
        $region61: #{tpu_custom_call.1} parent=59 // pred_check
          %p338 = pneg %p148
        $region62: #{tpu_custom_call.1} parent=59 // pred_check_branch
          %340 = sbr.rel (%p338) target = $region64
        $region63: #{tpu_custom_call.1} parent=59 // pred_region
          %s341 = sand.u32 %s133, 1
          %s342 = scalar_lea.sflag [#allocation4], %s341
          %s343 = sand.u32 %s133, 1
          %s344 = smul.addr %s343, 8
          %s345 = scalar_lea.vmem [#allocation10], %s344
          %346 = dma.done %s342, 128
        $region64: #{tpu_custom_call.1} parent=59 // pred_fallthru
          _
      $region60: #{tpu_custom_call.1} parent=5 // pred_fallthru
        _
    $region6: #{tpu_custom_call.1} parent=1 // loop_footer
      %s24 = sadd.s32 1, %s20
    $region7: #{tpu_custom_call.1} parent=1 // loop_footer_branch
      %19 = sbr.rel target = $region3
    $region8: #{tpu_custom_call.1} parent=1 // loop_exit
      _
    %347 = vsyncpa [#allocation3], 1
    %s348 = scalar_lea.sflag [#allocation3], 1
    %349 = vsyncpa %s348, 1
    %350 = vsyncpa [#allocation8], 1
    %s351 = scalar_lea.sflag [#allocation8], 1
    %352 = vsyncpa %s351, 1
    %353 = vsyncpa [#allocation4], 1
    %s354 = scalar_lea.sflag [#allocation4], 1
    %355 = vsyncpa %s354, 1
    %356 = vsyncpa [#allocation5], 1
    %s357 = scalar_lea.sflag [#allocation5], 1
    %358 = vsyncpa %s357, 1

</llo_original>
